<compile_context>
chip_gen: v7x
topology: tpu7x:2x2x1
jax: 0.10.0
libtpu: 0.0.40
codegen_flags: <defaults>
</compile_context>

<pallas_src>
import functools
import math

import jax
import jax.numpy as jnp
from jax.experimental import pallas as pl
from jax.experimental.pallas import tpu as pltpu


# ----------------------------------------------------------------------------
# Kernels
# ----------------------------------------------------------------------------
def _sigsoftmax_kernel(x_ref, o_ref, *, epsilon):
    """Unmasked SigSoftmax over the last axis of a (row_tile, D) block."""
    x = x_ref[...].astype(jnp.float32)
    m = jnp.max(x, axis=-1, keepdims=True)
    # exp(x + log(sigmoid(x)+eps) - m) == (sigmoid(x)+eps) * exp(x - m)
    e = (jax.nn.sigmoid(x) + jnp.float32(epsilon)) * jnp.exp(x - m)
    s = jnp.sum(e, axis=-1, keepdims=True)
    o_ref[...] = (e * pl.reciprocal(s, approx=False)).astype(o_ref.dtype)


def _sigsoftmax_masked_kernel(x_ref, mask_ref, o_ref, *, epsilon):
    """Masked SigSoftmax: masked_fill(~mask, -inf) semantics."""
    x = x_ref[...].astype(jnp.float32)
    mask = mask_ref[...]
    # Row max over valid entries only (no transcendental touches -inf).
    xm = jnp.where(mask, x, jnp.float32(-jnp.inf))
    m = jnp.max(xm, axis=-1, keepdims=True)
    e = (jax.nn.sigmoid(x) + jnp.float32(epsilon)) * jnp.exp(x - m)
    e = jnp.where(mask, e, jnp.float32(0.0))  # numerator-zeroing == -inf fill
    s = jnp.sum(e, axis=-1, keepdims=True)
    # Fully-masked rows give 0/0 = NaN, matching the reference (-inf softmax).
    o_ref[...] = (e * pl.reciprocal(s, approx=False)).astype(o_ref.dtype)


# ----------------------------------------------------------------------------
# Tiling helpers
# ----------------------------------------------------------------------------
def _cdiv(a, b):
    return -(-a // b)


def _round_up(a, b):
    return _cdiv(a, b) * b


def _choose_row_tile(rows, D, x_itemsize, out_itemsize, has_mask,
                     budget_bytes=24 * 1024 * 1024):
    """Largest row block (multiple of 8, <=1024) whose VMEM footprint fits budget.

    Footprint per row of one grid step:
      double-buffered input/output DMA slabs (+ bool mask) + ~4 f32 compute temps.
    """
    io = 2 * (x_itemsize + out_itemsize + (1 if has_mask else 0)) * D
    tmp = 4 * 4 * D
    per_row = io + tmp
    tile = (budget_bytes // per_row) // 8 * 8
    tile = max(8, min(1024, tile))
    # Never larger than the (8-padded) row count.
    tile = min(tile, _round_up(rows, 8))
    return tile


# ----------------------------------------------------------------------------
# Wrapper
# ----------------------------------------------------------------------------
def sig_softmax(x, mask=None, *, epsilon=1e-12, row_tile=None,
                vmem_limit_bytes=48 * 1024 * 1024):
    """SigSoftmax along the last axis of x. mask (bool, broadcastable) optional."""
    orig_shape = x.shape
    D = orig_shape[-1]
    rows = int(math.prod(orig_shape[:-1])) if len(orig_shape) > 1 else 1

    x2 = x.reshape(rows, D)
    has_mask = mask is not None
    if has_mask:
        mask2 = jnp.broadcast_to(mask, orig_shape).reshape(rows, D)

    if row_tile is None:
        row_tile = _choose_row_tile(
            rows, D, x2.dtype.itemsize, jnp.dtype(x.dtype).itemsize, has_mask)
    else:
        row_tile = max(8, _round_up(int(row_tile), 8))
        row_tile = min(row_tile, _round_up(rows, 8))

    # Balance the tile across the chosen number of steps to minimize padding.
    num_steps = _cdiv(rows, row_tile)
    row_tile = _round_up(_cdiv(rows, num_steps), 8)
    padded_rows = row_tile * num_steps

    if padded_rows != rows:
        pad = padded_rows - rows
        x2 = jnp.pad(x2, ((0, pad), (0, 0)))
        if has_mask:
            # Pad with True so padded rows stay finite (they are sliced off).
            mask2 = jnp.pad(mask2, ((0, pad), (0, 0)), constant_values=True)

    compiler_params = pltpu.CompilerParams(
        dimension_semantics=("parallel",),
        vmem_limit_bytes=vmem_limit_bytes,
    )
    row_spec = pl.BlockSpec((row_tile, D), lambda i: (i, 0))

    if has_mask:
        kernel = functools.partial(_sigsoftmax_masked_kernel, epsilon=epsilon)
        in_specs = [row_spec, row_spec]
        args = (x2, mask2)
    else:
        kernel = functools.partial(_sigsoftmax_kernel, epsilon=epsilon)
        in_specs = [row_spec]
        args = (x2,)

    out2 = pl.pallas_call(
        kernel,
        out_shape=jax.ShapeDtypeStruct((padded_rows, D), x.dtype),
        grid_spec=pltpu.PrefetchScalarGridSpec(
            num_scalar_prefetch=0,
            grid=(num_steps,),
            in_specs=in_specs,
            out_specs=row_spec,
        ),
        compiler_params=compiler_params,
    )(*args)

    if padded_rows != rows:
        out2 = out2[:rows]
    return out2.reshape(orig_shape)


# ----------------------------------------------------------------------------
# Reference & test
# ----------------------------------------------------------------------------
def _reference(x, mask=None, epsilon=1e-12):
    xf = x.astype(jnp.float32)
    if mask is not None:
        xf = jnp.where(mask, xf, -jnp.inf)
    logits = xf + jnp.log(jax.nn.sigmoid(xf) + epsilon)
    return jax.nn.softmax(logits, axis=-1).astype(x.dtype)


if __name__ == "__main__":
    key = jax.random.PRNGKey(0)
    kx, km, k2 = jax.random.split(key, 3)

    # Attention-score-like input: (batch, heads, seq, seq)
    x = jax.random.normal(kx, (2, 4, 16, 16), dtype=jnp.float32) * 3.0

    # 1) Unmasked case (specialized path: no mask traffic).
    y = jax.block_until_ready(sig_softmax(x))
    y_ref = _reference(x)
    assert jnp.allclose(y, y_ref, atol=1e-5, rtol=1e-5), "unmasked mismatch"

    # 2) Masked case.
    mask = jax.random.uniform(km, (2, 4, 16, 16)) > 0.2
    mask = mask.at[..., 0].set(True)  # at least one valid entry per row
    ym = jax.block_until_ready(sig_softmax(x, mask))
    ym_ref = _reference(x, mask)
    assert jnp.allclose(ym, ym_ref, atol=1e-5, rtol=1e-5), "masked mismatch"

    # 3) bf16 I/O + rows not a multiple of the tile (exercises padding path).
    xb = (jax.random.normal(k2, (3, 41, 64), dtype=jnp.float32) * 2.0
          ).astype(jnp.bfloat16)
    yb = jax.block_until_ready(sig_softmax(xb, row_tile=64))
    yb_ref = _reference(xb)
    assert jnp.allclose(yb.astype(jnp.float32), yb_ref.astype(jnp.float32),
                        atol=1.5e-2, rtol=1.5e-2), "bf16/padded mismatch"

    print("KERNEL_OK")
</pallas_src>

<mosaic_0001>
module attributes {stable_mosaic.version = 11 : i64} {
  func.func @_sigsoftmax_kernel(%arg0: i32, %arg1: memref<128x16xf32, #tpu.memory_space<vmem>>, %arg2: memref<128x16xf32, #tpu.memory_space<vmem>>) attributes {dimension_semantics = [#tpu.dimension_semantics<parallel>], iteration_bounds = array<i64: 1>, scalar_prefetch = 0 : i64, scratch_operands = 0 : i64, tpu.core_type = #tpu.core_type<tc>, window_params = [{transform_indices = @transform_0, window_bounds = array<i64: 128, 16>}, {transform_indices = @transform_1, window_bounds = array<i64: 128, 16>}]} {
    %c0 = arith.constant 0 : index
    %c0_0 = arith.constant 0 : index
    %0 = vector.load %arg1[%c0, %c0_0] : memref<128x16xf32, #tpu.memory_space<vmem>>, vector<128x16xf32>
    %cst = arith.constant dense<0xFF800000> : vector<128xf32>
    %1 = vector.multi_reduction <maximumf>, %0, %cst [1] : vector<128x16xf32> to vector<128xf32>
    %2 = vector.shape_cast %1 : vector<128xf32> to vector<128x1xf32>
    %3 = arith.negf %0 : vector<128x16xf32>
    %4 = math.exp %3 : vector<128x16xf32>
    %cst_1 = arith.constant 1.000000e+00 : f32
    %5 = vector.broadcast %cst_1 : f32 to vector<128x16xf32>
    %6 = arith.addf %5, %4 : vector<128x16xf32>
    %7 = arith.divf %5, %6 : vector<128x16xf32>
    %cst_2 = arith.constant 9.99999996E-13 : f32
    %8 = vector.broadcast %cst_2 : f32 to vector<128x16xf32>
    %9 = arith.addf %7, %8 : vector<128x16xf32>
    %10 = vector.broadcast %2 : vector<128x1xf32> to vector<128x16xf32>
    %11 = arith.subf %0, %10 : vector<128x16xf32>
    %12 = math.exp %11 : vector<128x16xf32>
    %13 = arith.mulf %9, %12 : vector<128x16xf32>
    %cst_3 = arith.constant dense<0.000000e+00> : vector<128xf32>
    %14 = vector.multi_reduction <add>, %13, %cst_3 [1] : vector<128x16xf32> to vector<128xf32>
    %15 = vector.shape_cast %14 : vector<128xf32> to vector<128x1xf32>
    %16 = tpu.reciprocal %15 : vector<128x1xf32> -> vector<128x1xf32>
    %17 = vector.broadcast %16 : vector<128x1xf32> to vector<128x16xf32>
    %18 = arith.mulf %13, %17 : vector<128x16xf32>
    %c0_4 = arith.constant 0 : index
    %c0_5 = arith.constant 0 : index
    %19 = vector.load %arg2[%c0_4, %c0_5] : memref<128x16xf32, #tpu.memory_space<vmem>>, vector<128x16xf32>
    tpu.vector_store %arg2[%c0_4, %c0_5], %18 {strides = array<i32>} : memref<128x16xf32, #tpu.memory_space<vmem>>, vector<128x16xf32>,
    return
  }
  func.func @transform_0(%arg0: i32) -> (i32, i32) {
    %c0_i32 = arith.constant 0 : i32
    %c0_i32_0 = arith.constant 0 : i32
    return %arg0, %c0_i32 : i32, i32
  }
  func.func @transform_1(%arg0: i32) -> (i32, i32) {
    %c0_i32 = arith.constant 0 : i32
    %c0_i32_0 = arith.constant 0 : i32
    return %arg0, %c0_i32 : i32, i32
  }
}

</mosaic_0001>

<llo_original>
// kernel: tpu_custom_call.1
$region0: #{tpu_custom_call.1}
  #allocation0 [shape = 'u32[]', space=smem, size = 0x4, offset = 0x4, fixed_abs, tag = 'smem constant byte address 0x4 - core index']
  #allocation1 [shape = 'u32[144,128]{1,0:T(1,128)}', space=vmem, size = 0x12000, scoped, tag = 'internal scratch']
  %s0 = inlined_call_operand.vmem [shape: f32[128,16], index: 0, kind: input, shape index: {}]
  %s1 = inlined_call_operand.vmem [shape: f32[128,16], index: 1, kind: output, shape index: {}]
  %s2 = sld [smem:[#allocation0]]
  $region14: #{tpu_custom_call.1} parent=0
    _
  %s4 = ssub.s32 1, %s2
  %s5 = scalar_select 0, %s4, %s2
  // Predicated region
  $region2: #{tpu_custom_call.1} parent=0 // pred_check
    _
  $region3: #{tpu_custom_call.1} parent=0 // pred_check_branch
    %7 = sbr.rel (0) target = $region5
  $region4: #{tpu_custom_call.1} parent=0 // pred_region
    _
  $region5: #{tpu_custom_call.1} parent=0 // pred_fallthru
    _
  %v8 = vld [vmem:[%s0] sm:$0xff]
  %v9 = vld [vmem:[%s0 + $0x8] sm:$0xff]
  %v10 = vld [vmem:[%s0 + $0x10] sm:$0xff]
  %v11 = vld [vmem:[%s0 + $0x18] sm:$0xff]
  %v12 = vld [vmem:[%s0 + $0x20] sm:$0xff]
  %v13 = vld [vmem:[%s0 + $0x28] sm:$0xff]
  %v14 = vld [vmem:[%s0 + $0x30] sm:$0xff]
  %v15 = vld [vmem:[%s0 + $0x38] sm:$0xff]
  %v16 = vld [vmem:[%s0 + $0x40] sm:$0xff]
  %v17 = vld [vmem:[%s0 + $0x48] sm:$0xff]
  %v18 = vld [vmem:[%s0 + $0x50] sm:$0xff]
  %v19 = vld [vmem:[%s0 + $0x58] sm:$0xff]
  %v20 = vld [vmem:[%s0 + $0x60] sm:$0xff]
  %v21 = vld [vmem:[%s0 + $0x68] sm:$0xff]
  %v22 = vld [vmem:[%s0 + $0x70] sm:$0xff]
  %v23 = vld [vmem:[%s0 + $0x78] sm:$0xff]
  %vm24 = vcmask 130048
  %v25 = vsel %vm24, %v8, -inf
  %26 = vmax.xlane.f32.xlu0 %v25
  %v27 = vpop.xlane.xlu0 %26
  %v28 = vsel %vm24, %v9, -inf
  %29 = vmax.xlane.f32.xlu0 %v28
  %v30 = vpop.xlane.xlu0 %29
  %v31 = vsel %vm24, %v10, -inf
  %32 = vmax.xlane.f32.xlu0 %v31
  %v33 = vpop.xlane.xlu0 %32
  %v34 = vsel %vm24, %v11, -inf
  %35 = vmax.xlane.f32.xlu0 %v34
  %v36 = vpop.xlane.xlu0 %35
  %v37 = vsel %vm24, %v12, -inf
  %38 = vmax.xlane.f32.xlu0 %v37
  %v39 = vpop.xlane.xlu0 %38
  %v40 = vsel %vm24, %v13, -inf
  %41 = vmax.xlane.f32.xlu0 %v40
  %v42 = vpop.xlane.xlu0 %41
  %v43 = vsel %vm24, %v14, -inf
  %44 = vmax.xlane.f32.xlu0 %v43
  %v45 = vpop.xlane.xlu0 %44
  %v46 = vsel %vm24, %v15, -inf
  %47 = vmax.xlane.f32.xlu0 %v46
  %v48 = vpop.xlane.xlu0 %47
  %v49 = vsel %vm24, %v16, -inf
  %50 = vmax.xlane.f32.xlu0 %v49
  %v51 = vpop.xlane.xlu0 %50
  %v52 = vsel %vm24, %v17, -inf
  %53 = vmax.xlane.f32.xlu0 %v52
  %v54 = vpop.xlane.xlu0 %53
  %v55 = vsel %vm24, %v18, -inf
  %56 = vmax.xlane.f32.xlu0 %v55
  %v57 = vpop.xlane.xlu0 %56
  %v58 = vsel %vm24, %v19, -inf
  %59 = vmax.xlane.f32.xlu0 %v58
  %v60 = vpop.xlane.xlu0 %59
  %v61 = vsel %vm24, %v20, -inf
  %62 = vmax.xlane.f32.xlu0 %v61
  %v63 = vpop.xlane.xlu0 %62
  %v64 = vsel %vm24, %v21, -inf
  %65 = vmax.xlane.f32.xlu0 %v64
  %v66 = vpop.xlane.xlu0 %65
  %v67 = vsel %vm24, %v22, -inf
  %68 = vmax.xlane.f32.xlu0 %v67
  %v69 = vpop.xlane.xlu0 %68
  %v70 = vsel %vm24, %v23, -inf
  %71 = vmax.xlane.f32.xlu0 %v70
  %v72 = vpop.xlane.xlu0 %71
  %v73 = vxor.u32 %v8, 2147483648
  %v74 = vxor.u32 %v9, 2147483648
  %v75 = vxor.u32 %v10, 2147483648
  %v76 = vxor.u32 %v11, 2147483648
  %v77 = vxor.u32 %v12, 2147483648
  %v78 = vxor.u32 %v13, 2147483648
  %v79 = vxor.u32 %v14, 2147483648
  %v80 = vxor.u32 %v15, 2147483648
  %v81 = vxor.u32 %v16, 2147483648
  %v82 = vxor.u32 %v17, 2147483648
  %v83 = vxor.u32 %v18, 2147483648
  %v84 = vxor.u32 %v19, 2147483648
  %v85 = vxor.u32 %v20, 2147483648
  %v86 = vxor.u32 %v21, 2147483648
  %v87 = vxor.u32 %v22, 2147483648
  %v88 = vxor.u32 %v23, 2147483648
  %v89 = vmul.f32 %v73, 1.442695
  %v90 = vpow.pop %v89
  %v91 = vmul.f32 %v74, 1.442695
  %v92 = vpow.pop %v91
  %v93 = vmul.f32 %v75, 1.442695
  %v94 = vpow.pop %v93
  %v95 = vmul.f32 %v76, 1.442695
  %v96 = vpow.pop %v95
  %v97 = vmul.f32 %v77, 1.442695
  %v98 = vpow.pop %v97
  %v99 = vmul.f32 %v78, 1.442695
  %v100 = vpow.pop %v99
  %v101 = vmul.f32 %v79, 1.442695
  %v102 = vpow.pop %v101
  %v103 = vmul.f32 %v80, 1.442695
  %v104 = vpow.pop %v103
  %v105 = vmul.f32 %v81, 1.442695
  %v106 = vpow.pop %v105
  %v107 = vmul.f32 %v82, 1.442695
  %v108 = vpow.pop %v107
  %v109 = vmul.f32 %v83, 1.442695
  %v110 = vpow.pop %v109
  %v111 = vmul.f32 %v84, 1.442695
  %v112 = vpow.pop %v111
  %v113 = vmul.f32 %v85, 1.442695
  %v114 = vpow.pop %v113
  %v115 = vmul.f32 %v86, 1.442695
  %v116 = vpow.pop %v115
  %v117 = vmul.f32 %v87, 1.442695
  %v118 = vpow.pop %v117
  %v119 = vmul.f32 %v88, 1.442695
  %v120 = vpow.pop %v119
  %v121 = vadd.f32 %v90, 1.0
  %v122 = vadd.f32 %v92, 1.0
  %v123 = vadd.f32 %v94, 1.0
  %v124 = vadd.f32 %v96, 1.0
  %v125 = vadd.f32 %v98, 1.0
  %v126 = vadd.f32 %v100, 1.0
  %v127 = vadd.f32 %v102, 1.0
  %v128 = vadd.f32 %v104, 1.0
  %v129 = vadd.f32 %v106, 1.0
  %v130 = vadd.f32 %v108, 1.0
  %v131 = vadd.f32 %v110, 1.0
  %v132 = vadd.f32 %v112, 1.0
  %v133 = vadd.f32 %v114, 1.0
  %v134 = vadd.f32 %v116, 1.0
  %v135 = vadd.f32 %v118, 1.0
  %v136 = vadd.f32 %v120, 1.0
  %v137 = vrcp.pop %v121
  %v138 = vmul.f32 1.0, %v137
  %v139 = vrcp.pop %v122
  %v140 = vmul.f32 1.0, %v139
  %v141 = vrcp.pop %v123
  %v142 = vmul.f32 1.0, %v141
  %v143 = vrcp.pop %v124
  %v144 = vmul.f32 1.0, %v143
  %v145 = vrcp.pop %v125
  %v146 = vmul.f32 1.0, %v145
  %v147 = vrcp.pop %v126
  %v148 = vmul.f32 1.0, %v147
  %v149 = vrcp.pop %v127
  %v150 = vmul.f32 1.0, %v149
  %v151 = vrcp.pop %v128
  %v152 = vmul.f32 1.0, %v151
  %v153 = vrcp.pop %v129
  %v154 = vmul.f32 1.0, %v153
  %v155 = vrcp.pop %v130
  %v156 = vmul.f32 1.0, %v155
  %v157 = vrcp.pop %v131
  %v158 = vmul.f32 1.0, %v157
  %v159 = vrcp.pop %v132
  %v160 = vmul.f32 1.0, %v159
  %v161 = vrcp.pop %v133
  %v162 = vmul.f32 1.0, %v161
  %v163 = vrcp.pop %v134
  %v164 = vmul.f32 1.0, %v163
  %v165 = vrcp.pop %v135
  %v166 = vmul.f32 1.0, %v165
  %v167 = vrcp.pop %v136
  %v168 = vmul.f32 1.0, %v167
  %v169 = vadd.f32 %v138, 1e-12
  %v170 = vadd.f32 %v140, 1e-12
  %v171 = vadd.f32 %v142, 1e-12
  %v172 = vadd.f32 %v144, 1e-12
  %v173 = vadd.f32 %v146, 1e-12
  %v174 = vadd.f32 %v148, 1e-12
  %v175 = vadd.f32 %v150, 1e-12
  %v176 = vadd.f32 %v152, 1e-12
  %v177 = vadd.f32 %v154, 1e-12
  %v178 = vadd.f32 %v156, 1e-12
  %v179 = vadd.f32 %v158, 1e-12
  %v180 = vadd.f32 %v160, 1e-12
  %v181 = vadd.f32 %v162, 1e-12
  %v182 = vadd.f32 %v164, 1e-12
  %v183 = vadd.f32 %v166, 1e-12
  %v184 = vadd.f32 %v168, 1e-12
  %v185 = vsub.f32 %v8, %v27
  %v186 = vsub.f32 %v9, %v30
  %v187 = vsub.f32 %v10, %v33
  %v188 = vsub.f32 %v11, %v36
  %v189 = vsub.f32 %v12, %v39
  %v190 = vsub.f32 %v13, %v42
  %v191 = vsub.f32 %v14, %v45
  %v192 = vsub.f32 %v15, %v48
  %v193 = vsub.f32 %v16, %v51
  %v194 = vsub.f32 %v17, %v54
  %v195 = vsub.f32 %v18, %v57
  %v196 = vsub.f32 %v19, %v60
  %v197 = vsub.f32 %v20, %v63
  %v198 = vsub.f32 %v21, %v66
  %v199 = vsub.f32 %v22, %v69
  %v200 = vsub.f32 %v23, %v72
  %v201 = vmul.f32 %v185, 1.442695
  %v202 = vpow.pop %v201
  %v203 = vmul.f32 %v186, 1.442695
  %v204 = vpow.pop %v203
  %v205 = vmul.f32 %v187, 1.442695
  %v206 = vpow.pop %v205
  %v207 = vmul.f32 %v188, 1.442695
  %v208 = vpow.pop %v207
  %v209 = vmul.f32 %v189, 1.442695
  %v210 = vpow.pop %v209
  %v211 = vmul.f32 %v190, 1.442695
  %v212 = vpow.pop %v211
  %v213 = vmul.f32 %v191, 1.442695
  %v214 = vpow.pop %v213
  %v215 = vmul.f32 %v192, 1.442695
  %v216 = vpow.pop %v215
  %v217 = vmul.f32 %v193, 1.442695
  %v218 = vpow.pop %v217
  %v219 = vmul.f32 %v194, 1.442695
  %v220 = vpow.pop %v219
  %v221 = vmul.f32 %v195, 1.442695
  %v222 = vpow.pop %v221
  %v223 = vmul.f32 %v196, 1.442695
  %v224 = vpow.pop %v223
  %v225 = vmul.f32 %v197, 1.442695
  %v226 = vpow.pop %v225
  %v227 = vmul.f32 %v198, 1.442695
  %v228 = vpow.pop %v227
  %v229 = vmul.f32 %v199, 1.442695
  %v230 = vpow.pop %v229
  %v231 = vmul.f32 %v200, 1.442695
  %v232 = vpow.pop %v231
  %v233 = vmul.f32 %v169, %v202
  %v234 = vmul.f32 %v170, %v204
  %v235 = vmul.f32 %v171, %v206
  %v236 = vmul.f32 %v172, %v208
  %v237 = vmul.f32 %v173, %v210
  %v238 = vmul.f32 %v174, %v212
  %v239 = vmul.f32 %v175, %v214
  %v240 = vmul.f32 %v176, %v216
  %v241 = vmul.f32 %v177, %v218
  %v242 = vmul.f32 %v178, %v220
  %v243 = vmul.f32 %v179, %v222
  %v244 = vmul.f32 %v180, %v224
  %v245 = vmul.f32 %v181, %v226
  %v246 = vmul.f32 %v182, %v228
  %v247 = vmul.f32 %v183, %v230
  %v248 = vmul.f32 %v184, %v232
  %v249 = vsel %vm24, %v233, 0.0
  %250 = vadd.xlane.f32.xlu0 %v249
  %v251 = vpop.xlane.xlu0 %250
  %v252 = vsel %vm24, %v234, 0.0
  %253 = vadd.xlane.f32.xlu0 %v252
  %v254 = vpop.xlane.xlu0 %253
  %v255 = vsel %vm24, %v235, 0.0
  %256 = vadd.xlane.f32.xlu0 %v255
  %v257 = vpop.xlane.xlu0 %256
  %v258 = vsel %vm24, %v236, 0.0
  %259 = vadd.xlane.f32.xlu0 %v258
  %v260 = vpop.xlane.xlu0 %259
  %v261 = vsel %vm24, %v237, 0.0
  %262 = vadd.xlane.f32.xlu0 %v261
  %v263 = vpop.xlane.xlu0 %262
  %v264 = vsel %vm24, %v238, 0.0
  %265 = vadd.xlane.f32.xlu0 %v264
  %v266 = vpop.xlane.xlu0 %265
  %v267 = vsel %vm24, %v239, 0.0
  %268 = vadd.xlane.f32.xlu0 %v267
  %v269 = vpop.xlane.xlu0 %268
  %v270 = vsel %vm24, %v240, 0.0
  %271 = vadd.xlane.f32.xlu0 %v270
  %v272 = vpop.xlane.xlu0 %271
  %v273 = vsel %vm24, %v241, 0.0
  %274 = vadd.xlane.f32.xlu0 %v273
  %v275 = vpop.xlane.xlu0 %274
  %v276 = vsel %vm24, %v242, 0.0
  %277 = vadd.xlane.f32.xlu0 %v276
  %v278 = vpop.xlane.xlu0 %277
  %v279 = vsel %vm24, %v243, 0.0
  %280 = vadd.xlane.f32.xlu0 %v279
  %v281 = vpop.xlane.xlu0 %280
  %v282 = vsel %vm24, %v244, 0.0
  %283 = vadd.xlane.f32.xlu0 %v282
  %v284 = vpop.xlane.xlu0 %283
  %v285 = vsel %vm24, %v245, 0.0
  %286 = vadd.xlane.f32.xlu0 %v285
  %v287 = vpop.xlane.xlu0 %286
  %v288 = vsel %vm24, %v246, 0.0
  %289 = vadd.xlane.f32.xlu0 %v288
  %v290 = vpop.xlane.xlu0 %289
  %v291 = vsel %vm24, %v247, 0.0
  %292 = vadd.xlane.f32.xlu0 %v291
  %v293 = vpop.xlane.xlu0 %292
  %v294 = vsel %vm24, %v248, 0.0
  %295 = vadd.xlane.f32.xlu0 %v294
  %v296 = vpop.xlane.xlu0 %295
  %v297 = vrcp.pop %v251
  %v298 = vrcp.pop %v254
  %v299 = vrcp.pop %v257
  %v300 = vrcp.pop %v260
  %v301 = vrcp.pop %v263
  %v302 = vrcp.pop %v266
  %v303 = vrcp.pop %v269
  %v304 = vrcp.pop %v272
  %v305 = vrcp.pop %v275
  %v306 = vrcp.pop %v278
  %v307 = vrcp.pop %v281
  %v308 = vrcp.pop %v284
  %v309 = vrcp.pop %v287
  %v310 = vrcp.pop %v290
  %v311 = vrcp.pop %v293
  %v312 = vrcp.pop %v296
  %v313 = vmul.f32 %v233, %v297
  %v314 = vmul.f32 %v234, %v298
  %v315 = vmul.f32 %v235, %v299
  %v316 = vmul.f32 %v236, %v300
  %v317 = vmul.f32 %v237, %v301
  %v318 = vmul.f32 %v238, %v302
  %v319 = vmul.f32 %v239, %v303
  %v320 = vmul.f32 %v240, %v304
  %v321 = vmul.f32 %v241, %v305
  %v322 = vmul.f32 %v242, %v306
  %v323 = vmul.f32 %v243, %v307
  %v324 = vmul.f32 %v244, %v308
  %v325 = vmul.f32 %v245, %v309
  %v326 = vmul.f32 %v246, %v310
  %v327 = vmul.f32 %v247, %v311
  %v328 = vmul.f32 %v248, %v312
  %329 = vst.msk [vmem:[%s1] sm:$0xff] %vm24, %v313
  %330 = vst.msk [vmem:[%s1 + $0x8] sm:$0xff] %vm24, %v314
  %331 = vst.msk [vmem:[%s1 + $0x10] sm:$0xff] %vm24, %v315
  %332 = vst.msk [vmem:[%s1 + $0x18] sm:$0xff] %vm24, %v316
  %333 = vst.msk [vmem:[%s1 + $0x20] sm:$0xff] %vm24, %v317
  %334 = vst.msk [vmem:[%s1 + $0x28] sm:$0xff] %vm24, %v318
  %335 = vst.msk [vmem:[%s1 + $0x30] sm:$0xff] %vm24, %v319
  %336 = vst.msk [vmem:[%s1 + $0x38] sm:$0xff] %vm24, %v320
  %337 = vst.msk [vmem:[%s1 + $0x40] sm:$0xff] %vm24, %v321
  %338 = vst.msk [vmem:[%s1 + $0x48] sm:$0xff] %vm24, %v322
  %339 = vst.msk [vmem:[%s1 + $0x50] sm:$0xff] %vm24, %v323
  %340 = vst.msk [vmem:[%s1 + $0x58] sm:$0xff] %vm24, %v324
  %341 = vst.msk [vmem:[%s1 + $0x60] sm:$0xff] %vm24, %v325
  %342 = vst.msk [vmem:[%s1 + $0x68] sm:$0xff] %vm24, %v326
  %343 = vst.msk [vmem:[%s1 + $0x70] sm:$0xff] %vm24, %v327
  %344 = vst.msk [vmem:[%s1 + $0x78] sm:$0xff] %vm24, %v328
  // Predicated region
  $region6: #{tpu_custom_call.1} parent=0 // pred_check
    _
  $region7: #{tpu_custom_call.1} parent=0 // pred_check_branch
    %346 = sbr.rel (0) target = $region9
  $region8: #{tpu_custom_call.1} parent=0 // pred_region
    _
  $region9: #{tpu_custom_call.1} parent=0 // pred_fallthru
    _
  // Predicated region
  $region10: #{tpu_custom_call.1} parent=0 // pred_check
    _
  $region11: #{tpu_custom_call.1} parent=0 // pred_check_branch
    %348 = sbr.rel (0) target = $region13
  $region12: #{tpu_custom_call.1} parent=0 // pred_region
    _
  $region13: #{tpu_custom_call.1} parent=0 // pred_fallthru
    _

</llo_original>
